<compile_context>
chip_gen: v6e
topology: v6e:2x2x1
jax: 0.10.0
libtpu: 0.0.40
codegen_flags: <defaults>
</compile_context>

<pallas_src>
import jax
import jax.numpy as jnp
from jax.experimental import pallas as pl
from jax.experimental.pallas import tpu as pltpu

_LANE = 128                                 # keep the output last dim lane-dense
_NEG_INF = -1e30                            # mask for padded logit columns (exp -> 0)
_DEFAULT_VMEM_BUDGET = 16 * 1024 * 1024     # fits the default scoped-VMEM limit on all generations


def linear_softmax_kernel(x_ref, w_ref, b_ref, o_ref):
    """Fused softmax(x @ W + b) on one batch tile.

    x_ref: [tm, D]      bf16 batch tile (pipelined per grid step)
    w_ref: [D, C_pad]   bf16 weight, resident in VMEM across all grid steps
    b_ref: [1, C_pad]   f32 bias (padded columns hold _NEG_INF)
    o_ref: [tm, C_pad]  bf16 probabilities (padded columns come out exactly 0)
    """
    # bf16 MXU inputs, f32 accumulation: native fast path on v5e/v6e/v7x.
    logits = jnp.dot(x_ref[...], w_ref[...], preferred_element_type=jnp.float32)
    logits = logits + b_ref[...]                   # f32 bias add keeps the -1e30 mask exact
    m = jnp.max(logits, axis=-1, keepdims=True)    # numerically-stable softmax, all in f32
    e = jnp.exp(logits - m)
    denom = jnp.sum(e, axis=-1, keepdims=True)
    # EUP approximate reciprocal: ~1e-3 rel error is below the bf16 output
    # quantization, and the EUP slot is free next to exp.
    o_ref[...] = (e * pl.reciprocal(denom, approx=True)).astype(o_ref.dtype)


def _round_up(v, m):
    return ((v + m - 1) // m) * m


def prepare_linear_params(weight, bias, lane=_LANE):
    """One-time parameter prep (call ONCE, not per forward pass).

    - transposes torch's [C, D] weight to [D, C_pad] and stores it in bf16
      (MXU-native, half the resident VMEM footprint)
    - pads the class dim to a lane multiple; padded weight columns are 0 and
      padded bias columns are a large negative f32, so exp() of those logits is
      exactly 0 and the softmax over the real classes is unchanged.
    """
    C, D = weight.shape
    c_pad = _round_up(max(C, 1), lane)
    w_t = jnp.zeros((D, c_pad), jnp.bfloat16).at[:, :C].set(weight.T.astype(jnp.bfloat16))
    b_p = jnp.full((1, c_pad), _NEG_INF, jnp.float32).at[0, :C].set(bias.astype(jnp.float32))
    return w_t, b_p


def linear_model_forward(x, w_t, b_pad, num_classes, *,
                         tm_max=1024,
                         vmem_budget_bytes=_DEFAULT_VMEM_BUDGET,
                         out_dtype=jnp.bfloat16,
                         trim_classes=False):
    """softmax(x @ weight.T + bias) with one fused, batch-tiled Pallas kernel.

    x:       [B, D]      any float dtype (cast to bf16 for the MXU; pass bf16 to
                         skip the cast and halve the x HBM read)
    w_t:     [D, C_pad]  bf16, from prepare_linear_params
    b_pad:   [1, C_pad]  f32,  from prepare_linear_params
    returns  [B, C_pad] bf16 probabilities (padded class columns are exactly 0),
             or [B, num_classes] if trim_classes=True (costs an extra strided copy).
    """
    B, D = x.shape
    Dw, C_pad = w_t.shape
    assert Dw == D, "weight/input dim mismatch"

    out_itemsize = jnp.dtype(out_dtype).itemsize
    resident_bytes = D * C_pad * 2 + C_pad * 4          # bf16 W + f32 bias, VMEM-resident

    def _vmem_bytes(t):
        dbl = 2                                         # double-buffered x / out tiles
        return resident_bytes + dbl * t * (D * 2 + C_pad * out_itemsize)

    if _vmem_bytes(8) > vmem_budget_bytes:
        # TODO(synk): add a class (N) / feature (K) reduction grid axis (pl.when
        # accumulated logits or online softmax) before the resident [D, C_pad]
        # weight outgrows v7x's ~32 MiB scoped / 64 MiB physical VMEM.
        raise ValueError(
            f"resident weight [{D},{C_pad}] + minimal tiles need "
            f"{_vmem_bytes(8)} B > budget {vmem_budget_bytes} B; "
            "class/feature tiling required (not implemented).")

    # Largest batch tile (multiple of 8) that fits the VMEM budget.
    tm_cap = max(8, (min(tm_max, _round_up(B, 8)) // 8) * 8)
    while tm_cap > 8 and _vmem_bytes(tm_cap) > vmem_budget_bytes:
        tm_cap = max(8, (tm_cap // 2 // 8) * 8)

    # Pick the number of grid steps first, then the tile, so row-padding waste
    # is bounded by < 8 rows per step (B=300 -> 1 step of 304 rows, 1.3% waste).
    n_steps = pl.cdiv(B, tm_cap)
    tm = _round_up(pl.cdiv(B, n_steps), 8)
    B_pad = tm * n_steps

    x = x.astype(jnp.bfloat16)       # no-op if the caller already keeps bf16 activations
    if B_pad != B:
        # zero rows give harmless softmax outputs; sliced off below
        x = jnp.pad(x, ((0, B_pad - B), (0, 0)))

    # v7x is the only multi-TC generation; splitting a 1-3 step grid across its
    # 2 cores adds overhead for no parallel work, so only ask for it with >= 4
    # steps (on v5e/v6e "parallel" vs "arbitrary" is a measured no-op).
    semantics = ("parallel",) if n_steps >= 4 else ("arbitrary",)
    compiler_kwargs = dict(dimension_semantics=semantics)
    if _vmem_bytes(tm) > _DEFAULT_VMEM_BUDGET:
        compiler_kwargs["vmem_limit_bytes"] = int(vmem_budget_bytes)

    out = pl.pallas_call(
        linear_softmax_kernel,
        out_shape=jax.ShapeDtypeStruct((B_pad, C_pad), out_dtype),
        grid_spec=pltpu.PrefetchScalarGridSpec(
            num_scalar_prefetch=0,
            grid=(n_steps,),
            in_specs=[
                pl.BlockSpec((tm, D), lambda i: (i, 0)),      # x: tiled over batch
                pl.BlockSpec((D, C_pad), lambda i: (0, 0)),   # W: resident in VMEM
                pl.BlockSpec((1, C_pad), lambda i: (0, 0)),   # b: resident in VMEM
            ],
            out_specs=pl.BlockSpec((tm, C_pad), lambda i: (i, 0)),
        ),
        compiler_params=pltpu.CompilerParams(**compiler_kwargs),
    )(x, w_t, b_pad)

    if B_pad != B:
        out = out[:B]                       # contiguous row slice, cheap
    if trim_classes:
        # Strided column slice = extra HBM round trip; avoid when the consumer
        # can ignore the padded class columns (they are exactly 0).
        out = out[:, :num_classes]
    return out


if __name__ == "__main__":
    # Tabular shapes consistent with the module: x is [batch, dim_input].
    # batch=300 exercises the 8-row padding path (runs as a single 304-row tile).
    batch, dim_input, num_classes = 300, 32, 4

    key = jax.random.PRNGKey(0)
    kx, kw, kb = jax.random.split(key, 3)

    x = jax.random.normal(kx, (batch, dim_input), dtype=jnp.float32)

    # Deterministic params mimicking nn.Linear's uniform(-1/sqrt(D), 1/sqrt(D))
    bound = 1.0 / (dim_input ** 0.5)
    weight = jax.random.uniform(kw, (num_classes, dim_input), jnp.float32,
                                minval=-bound, maxval=bound)
    bias = jax.random.uniform(kb, (num_classes,), jnp.float32,
                              minval=-bound, maxval=bound)

    # One-time parameter prep (transpose + lane padding + bf16 cast).
    w_t, b_pad = prepare_linear_params(weight, bias)

    out = linear_model_forward(x, w_t, b_pad, num_classes)   # [300, 128] bf16
    jax.block_until_ready(out)

    # Sanity check against plain-JAX f32 reference (tolerance covers bf16
    # inputs/outputs and the EUP approximate reciprocal).
    ref = jax.nn.softmax(x @ weight.T + bias, axis=-1)
    probs = out[:, :num_classes].astype(jnp.float32)   # test-side slice only

    assert out.shape == (batch, w_t.shape[1])
    assert jnp.all(jnp.isfinite(probs))
    assert jnp.allclose(probs, ref, rtol=2e-2, atol=2e-2), "mismatch vs reference"
    assert bool(jnp.all(out[:, num_classes:] == 0)), "padded class columns must be 0"
    assert jnp.allclose(jnp.sum(probs, axis=-1), 1.0, atol=2e-2)

    print("KERNEL_OK")
</pallas_src>

<mosaic_0001>
module attributes {stable_mosaic.version = 11 : i64} {
  func.func @linear_softmax_kernel(%arg0: i32, %arg1: memref<304x32xbf16, #tpu.memory_space<vmem>>, %arg2: memref<32x128xbf16, #tpu.memory_space<vmem>>, %arg3: memref<1x128xf32, #tpu.memory_space<vmem>>, %arg4: memref<304x128xbf16, #tpu.memory_space<vmem>>) attributes {dimension_semantics = [#tpu.dimension_semantics<arbitrary>], iteration_bounds = array<i64: 1>, scalar_prefetch = 0 : i64, scratch_operands = 0 : i64, tpu.core_type = #tpu.core_type<tc>, window_params = [{transform_indices = @transform_0, window_bounds = array<i64: 304, 32>}, {pipeline_mode = #tpu.pipeline_mode<synchronous>, transform_indices = @transform_1, window_bounds = array<i64: 32, 128>}, {pipeline_mode = #tpu.pipeline_mode<synchronous>, transform_indices = @transform_2, window_bounds = array<i64: 1, 128>}, {transform_indices = @transform_3, window_bounds = array<i64: 304, 128>}]} {
    %c0 = arith.constant 0 : index
    %c0_0 = arith.constant 0 : index
    %0 = vector.load %arg1[%c0, %c0_0] : memref<304x32xbf16, #tpu.memory_space<vmem>>, vector<304x32xbf16>
    %c0_1 = arith.constant 0 : index
    %c0_2 = arith.constant 0 : index
    %1 = vector.load %arg2[%c0_1, %c0_2] : memref<32x128xbf16, #tpu.memory_space<vmem>>, vector<32x128xbf16>
    %cst = arith.constant dense<0.000000e+00> : vector<304x128xf32>
    %2 = tpu.matmul %0, %1, %cst {dimension_numbers = #tpu.dot_dimension_numbers<[1], [0], [0], [1], [0, 0, 1, 1], [], []>} : vector<304x32xbf16>, vector<32x128xbf16>, vector<304x128xf32> -> vector<304x128xf32>
    %c0_3 = arith.constant 0 : index
    %c0_4 = arith.constant 0 : index
    %3 = vector.load %arg3[%c0_3, %c0_4] : memref<1x128xf32, #tpu.memory_space<vmem>>, vector<1x128xf32>
    %4 = vector.broadcast %3 : vector<1x128xf32> to vector<304x128xf32>
    %5 = arith.addf %2, %4 : vector<304x128xf32>
    %cst_5 = arith.constant dense<0xFF800000> : vector<304xf32>
    %6 = vector.multi_reduction <maximumf>, %5, %cst_5 [1] : vector<304x128xf32> to vector<304xf32>
    %7 = vector.shape_cast %6 : vector<304xf32> to vector<304x1xf32>
    %8 = vector.broadcast %7 : vector<304x1xf32> to vector<304x128xf32>
    %9 = arith.subf %5, %8 : vector<304x128xf32>
    %10 = math.exp %9 : vector<304x128xf32>
    %cst_6 = arith.constant dense<0.000000e+00> : vector<304xf32>
    %11 = vector.multi_reduction <add>, %10, %cst_6 [1] : vector<304x128xf32> to vector<304xf32>
    %12 = vector.shape_cast %11 : vector<304xf32> to vector<304x1xf32>
    %13 = tpu.reciprocal %12 {approx = true} : vector<304x1xf32> -> vector<304x1xf32>
    %14 = vector.broadcast %13 : vector<304x1xf32> to vector<304x128xf32>
    %15 = arith.mulf %10, %14 : vector<304x128xf32>
    %16 = arith.truncf %15 : vector<304x128xf32> to vector<304x128xbf16>
    %c0_7 = arith.constant 0 : index
    %c0_8 = arith.constant 0 : index
    %17 = vector.load %arg4[%c0_7, %c0_8] : memref<304x128xbf16, #tpu.memory_space<vmem>>, vector<304x128xbf16>
    tpu.vector_store %arg4[%c0_7, %c0_8], %16 {strides = array<i32>} : memref<304x128xbf16, #tpu.memory_space<vmem>>, vector<304x128xbf16>,
    return
  }
  func.func @transform_0(%arg0: i32) -> (i32, i32) {
    %c0_i32 = arith.constant 0 : i32
    %c0_i32_0 = arith.constant 0 : i32
    return %arg0, %c0_i32 : i32, i32
  }
  func.func @transform_1(%arg0: i32) -> (i32, i32) {
    %c0_i32 = arith.constant 0 : i32
    %c0_i32_0 = arith.constant 0 : i32
    %c0_i32_1 = arith.constant 0 : i32
    return %c0_i32, %c0_i32_0 : i32, i32
  }
  func.func @transform_2(%arg0: i32) -> (i32, i32) {
    %c0_i32 = arith.constant 0 : i32
    %c0_i32_0 = arith.constant 0 : i32
    %c0_i32_1 = arith.constant 0 : i32
    return %c0_i32, %c0_i32_0 : i32, i32
  }
  func.func @transform_3(%arg0: i32) -> (i32, i32) {
    %c0_i32 = arith.constant 0 : i32
    %c0_i32_0 = arith.constant 0 : i32
    return %arg0, %c0_i32 : i32, i32
  }
}

</mosaic_0001>

<llo_original>
// kernel: tpu_custom_call.1
$region0: #{tpu_custom_call.1}
  #allocation0 [shape = 'u32[]', space=smem, size = 0x4, offset = 0x4, fixed_abs, tag = 'smem constant byte address 0x4 - core index']
  #allocation1 [shape = 'u32[144,128]{1,0:T(1,128)}', space=vmem, size = 0x12000, scoped, tag = 'internal scratch']
  %s0 = inlined_call_operand.vmem [shape: bf16[304,32], index: 0, kind: input, shape index: {}]
  %s1 = inlined_call_operand.vmem [shape: bf16[32,128], index: 1, kind: input, shape index: {}]
  %s2 = inlined_call_operand.vmem [shape: f32[1,128], index: 2, kind: input, shape index: {}]
  %s3 = inlined_call_operand.hbm [shape: bf16[304,128], index: 3, kind: output, shape index: {}]
  %s4 = sld [smem:[#allocation0]]
  $region22: #{tpu_custom_call.1} parent=0
    _
  %s6 = ssub.s32 1, %s4
  %s7 = scalar_select 0, %s6, %s4
  $region1: #{tpu_custom_call.1} parent=0
    #allocation2 [shape = 'u8[77824]{0}', space=vmem, size = 0x13000, scoped, tag = 'output window, operand 0, single buffered']
    #allocation3 [shape = 's32[1]{0}', space=sflag, size = 0x4, scoped, tag = 'scoped memory for tpu_custom_call.1']
    %8 = vsyncpa [#allocation3], 0
    // Predicated region
    $region2: #{tpu_custom_call.1} parent=1 // pred_check
      _
    $region3: #{tpu_custom_call.1} parent=1 // pred_check_branch
      %10 = sbr.rel (0) target = $region5
    $region4: #{tpu_custom_call.1} parent=1 // pred_region
      _
    $region5: #{tpu_custom_call.1} parent=1 // pred_fallthru
      _
    // Predicated region
    $region6: #{tpu_custom_call.1} parent=1 // pred_check
      _
    $region7: #{tpu_custom_call.1} parent=1 // pred_check_branch
      %12 = sbr.rel (0) target = $region9
    $region8: #{tpu_custom_call.1} parent=1 // pred_region
      _
    $region9: #{tpu_custom_call.1} parent=1 // pred_fallthru
      _
    // Predicated region
    $region10: #{tpu_custom_call.1} parent=1 // pred_check
      _
    $region11: #{tpu_custom_call.1} parent=1 // pred_check_branch
      %14 = sbr.rel (0) target = $region13
    $region12: #{tpu_custom_call.1} parent=1 // pred_region
      _
    $region13: #{tpu_custom_call.1} parent=1 // pred_fallthru
      _
    %v16 = vld [vmem:[%s0] sm:$0xf]
    %v17 = vld [vmem:[%s0 + $0x4] sm:$0xf]
    %v18 = vld [vmem:[%s0 + $0x8] sm:$0xf]
    %v19 = vld [vmem:[%s0 + $0xc] sm:$0xf]
    %v20 = vld [vmem:[%s0 + $0x10] sm:$0xf]
    %v21 = vld [vmem:[%s0 + $0x14] sm:$0xf]
    %v22 = vld [vmem:[%s0 + $0x18] sm:$0xf]
    %v23 = vld [vmem:[%s0 + $0x1c] sm:$0xf]
    %v24 = vld [vmem:[%s0 + $0x20] sm:$0xf]
    %v25 = vld [vmem:[%s0 + $0x24] sm:$0xf]
    %v26 = vld [vmem:[%s0 + $0x28] sm:$0xf]
    %v27 = vld [vmem:[%s0 + $0x2c] sm:$0xf]
    %v28 = vld [vmem:[%s0 + $0x30] sm:$0xf]
    %v29 = vld [vmem:[%s0 + $0x34] sm:$0xf]
    %v30 = vld [vmem:[%s0 + $0x38] sm:$0xf]
    %v31 = vld [vmem:[%s0 + $0x3c] sm:$0xf]
    %v32 = vld [vmem:[%s0 + $0x40] sm:$0xf]
    %v33 = vld [vmem:[%s0 + $0x44] sm:$0xf]
    %v34 = vld [vmem:[%s0 + $0x48] sm:$0xf]
    %v35 = vld [vmem:[%s0 + $0x4c] sm:$0xf]
    %v36 = vld [vmem:[%s0 + $0x50] sm:$0xf]
    %v37 = vld [vmem:[%s0 + $0x54] sm:$0xf]
    %v38 = vld [vmem:[%s0 + $0x58] sm:$0xf]
    %v39 = vld [vmem:[%s0 + $0x5c] sm:$0xf]
    %v40 = vld [vmem:[%s0 + $0x60] sm:$0xf]
    %v41 = vld [vmem:[%s0 + $0x64] sm:$0xf]
    %v42 = vld [vmem:[%s0 + $0x68] sm:$0xf]
    %v43 = vld [vmem:[%s0 + $0x6c] sm:$0xf]
    %v44 = vld [vmem:[%s0 + $0x70] sm:$0xf]
    %v45 = vld [vmem:[%s0 + $0x74] sm:$0xf]
    %v46 = vld [vmem:[%s0 + $0x78] sm:$0xf]
    %v47 = vld [vmem:[%s0 + $0x7c] sm:$0xf]
    %v48 = vld [vmem:[%s0 + $0x80] sm:$0xf]
    %v49 = vld [vmem:[%s0 + $0x84] sm:$0xf]
    %v50 = vld [vmem:[%s0 + $0x88] sm:$0xf]
    %v51 = vld [vmem:[%s0 + $0x8c] sm:$0xf]
    %v52 = vld [vmem:[%s0 + $0x90] sm:$0xf]
    %v53 = vld [vmem:[%s0 + $0x94] sm:$0xf]
    %v54 = vld [vmem:[%s1] sm:$0xf]
    %v55 = vld [vmem:[%s1 + $0x4] sm:$0xf]
    %v56 = vld [vmem:[%s1 + $0x8] sm:$0xf]
    %v57 = vld [vmem:[%s1 + $0xc] sm:$0xf]
    %v58 = vld [vmem:[%s2] sm:$0x1]
    %v60 = vlaneseq
    %v61 = vshrl.u32 %v60, 7
    %v62 = vsub.s32 0, %v61
    %v63 = vrot.slane %v58, %v62
    %v103 = vunpack.c.l.b16 %v16
    %v104 = vunpack.c.l.b16 %v17
    %v105 = vunpack.c.l.b16 %v18
    %v106 = vunpack.c.l.b16 %v19
    %v107 = vunpack.c.l.b16 %v20
    %v108 = vunpack.c.l.b16 %v21
    %v109 = vunpack.c.l.b16 %v22
    %v110 = vunpack.c.l.b16 %v23
    %v111 = vunpack.c.l.b16 %v24
    %v112 = vunpack.c.l.b16 %v25
    %v113 = vunpack.c.l.b16 %v26
    %v114 = vunpack.c.l.b16 %v27
    %v115 = vunpack.c.l.b16 %v28
    %v116 = vunpack.c.l.b16 %v29
    %v117 = vunpack.c.l.b16 %v30
    %v118 = vunpack.c.l.b16 %v31
    %v119 = vunpack.c.l.b16 %v32
    %v120 = vunpack.c.l.b16 %v33
    %v121 = vunpack.c.l.b16 %v34
    %v122 = vunpack.c.l.b16 %v35
    %v123 = vunpack.c.l.b16 %v36
    %v124 = vunpack.c.l.b16 %v37
    %v125 = vunpack.c.l.b16 %v38
    %v126 = vunpack.c.l.b16 %v39
    %v127 = vunpack.c.l.b16 %v40
    %v128 = vunpack.c.l.b16 %v41
    %v129 = vunpack.c.l.b16 %v42
    %v130 = vunpack.c.l.b16 %v43
    %v131 = vunpack.c.l.b16 %v44
    %v132 = vunpack.c.l.b16 %v45
    %v133 = vunpack.c.l.b16 %v46
    %v134 = vunpack.c.l.b16 %v47
    %v135 = vunpack.c.l.b16 %v48
    %v136 = vunpack.c.l.b16 %v49
    %v137 = vunpack.c.l.b16 %v50
    %v138 = vunpack.c.l.b16 %v51
    %v139 = vunpack.c.l.b16 %v52
    %v140 = vunpack.c.l.b16 %v53
    %v141 = vpack.c.b16 %v104, %v103
    %v142 = vpack.c.b16 %v106, %v105
    %v143 = vpack.c.b16 %v108, %v107
    %v144 = vpack.c.b16 %v110, %v109
    %v145 = vpack.c.b16 %v112, %v111
    %v146 = vpack.c.b16 %v114, %v113
    %v147 = vpack.c.b16 %v116, %v115
    %v148 = vpack.c.b16 %v118, %v117
    %v149 = vpack.c.b16 %v120, %v119
    %v150 = vpack.c.b16 %v122, %v121
    %v151 = vpack.c.b16 %v124, %v123
    %v152 = vpack.c.b16 %v126, %v125
    %v153 = vpack.c.b16 %v128, %v127
    %v154 = vpack.c.b16 %v130, %v129
    %v155 = vpack.c.b16 %v132, %v131
    %v156 = vpack.c.b16 %v134, %v133
    %v157 = vpack.c.b16 %v136, %v135
    %v158 = vpack.c.b16 %v138, %v137
    %v159 = vpack.c.b16 %v140, %v139
    %v164 = vunpack.c.l.b16 %v54
    %v165 = vunpack.c.l.b16 %v55
    %v166 = vunpack.c.l.b16 %v56
    %v167 = vunpack.c.l.b16 %v57
    %v168 = vpack.c.b16 %v165, %v164
    %v169 = vpack.c.b16 %v167, %v166
    %vm172 = vcmask 261120
    %v174 = vsel %vm172, %v141, 0
    %v177 = vsel %vm172, %v142, 0
    %v180 = vsel %vm172, %v143, 0
    %v183 = vsel %vm172, %v144, 0
    %v186 = vsel %vm172, %v145, 0
    %v189 = vsel %vm172, %v146, 0
    %v192 = vsel %vm172, %v147, 0
    %v195 = vsel %vm172, %v148, 0
    %v198 = vsel %vm172, %v149, 0
    %v201 = vsel %vm172, %v150, 0
    %v204 = vsel %vm172, %v151, 0
    %v207 = vsel %vm172, %v152, 0
    %v210 = vsel %vm172, %v153, 0
    %v213 = vsel %vm172, %v154, 0
    %v216 = vsel %vm172, %v155, 0
    %v219 = vsel %vm172, %v156, 0
    %v222 = vsel %vm172, %v157, 0
    %v225 = vsel %vm172, %v158, 0
    %v228 = vsel %vm172, %v159, 0
    %230 = vmatprep.subr.bf16.mxu0 0
    %231 = vmatpush1.bf16.msra.mxu0 0
    %232 = vmatprep.subr.bf16.mxu0 0
    %233 = vmatpush1.bf16.msra.mxu0 0
    %234 = vmatprep.subr.bf16.mxu0 0
    %235 = vmatpush1.bf16.msra.mxu0 0
    %236 = vmatprep.subr.bf16.mxu0 0
    %237 = vmatpush1.bf16.msra.mxu0 0
    %238 = vmatprep.subr.bf16.mxu0 0
    %239 = vmatpush1.bf16.msra.mxu0 0
    %240 = vmatprep.subr.bf16.mxu0 0
    %241 = vmatpush1.bf16.msra.mxu0 0
    %242 = vmatprep.subr.bf16.mxu0 0
    %243 = vmatpush1.bf16.msra.mxu0 %v169
    %244 = vmatprep.subr.bf16.mxu0 0
    %245 = vmatpush1.bf16.msra.mxu0 %v168
    %246 = vmatprep.subr.bf16.mxu0 0
    %247 = vmatpush2.bf16.msra.mxu0 0
    %248 = vmatprep.subr.bf16.mxu0 0
    %249 = vmatpush2.bf16.msra.mxu0 0
    %250 = vmatprep.subr.bf16.mxu0 0
    %251 = vmatpush2.bf16.msra.mxu0 0
    %252 = vmatprep.subr.bf16.mxu0 0
    %253 = vmatpush2.bf16.msra.mxu0 0
    %254 = vmatprep.subr.bf16.mxu0 0
    %255 = vmatpush2.bf16.msra.mxu0 0
    %256 = vmatprep.subr.bf16.mxu0 0
    %257 = vmatpush2.bf16.msra.mxu0 0
    %258 = vmatprep.subr.bf16.mxu0 0
    %259 = vmatpush2.bf16.msra.mxu0 0
    %260 = vmatprep.subr.bf16.mxu0 0
    %261 = vmatpush2.bf16.msra.mxu0 0
    %262 = vmatprep.mubr.bf16.mxu0 0
    %263 = vmatmul.mubr.bf16.gmra.mxu0 %v174
    %v264 = vpop.f32.mrf.mxu0
    %v265 = vadd.f32 %v63, %v264
    %v266 = vpop.f32.mrf.mxu0
    %v267 = vpop.f32.mrf.mxu0
    %v268 = vadd.f32 %v63, %v267
    %v269 = vpop.f32.mrf.mxu0
    %270 = vmatprep.mubr.bf16.mxu0 0
    %271 = vmatmul.mubr.bf16.gmra.mxu0 %v177
    %v272 = vpop.f32.mrf.mxu0
    %v273 = vadd.f32 %v63, %v272
    %v274 = vpop.f32.mrf.mxu0
    %v275 = vpop.f32.mrf.mxu0
    %v276 = vadd.f32 %v63, %v275
    %v277 = vpop.f32.mrf.mxu0
    %278 = vmatprep.mubr.bf16.mxu0 0
    %279 = vmatmul.mubr.bf16.gmra.mxu0 %v180
    %v280 = vpop.f32.mrf.mxu0
    %v281 = vadd.f32 %v63, %v280
    %v282 = vpop.f32.mrf.mxu0
    %v283 = vpop.f32.mrf.mxu0
    %v284 = vadd.f32 %v63, %v283
    %v285 = vpop.f32.mrf.mxu0
    %286 = vmatprep.mubr.bf16.mxu0 0
    %287 = vmatmul.mubr.bf16.gmra.mxu0 %v183
    %v288 = vpop.f32.mrf.mxu0
    %v289 = vadd.f32 %v63, %v288
    %v290 = vpop.f32.mrf.mxu0
    %v291 = vpop.f32.mrf.mxu0
    %v292 = vadd.f32 %v63, %v291
    %v293 = vpop.f32.mrf.mxu0
    %294 = vmatprep.mubr.bf16.mxu0 0
    %295 = vmatmul.mubr.bf16.gmra.mxu0 %v186
    %v296 = vpop.f32.mrf.mxu0
    %v297 = vadd.f32 %v63, %v296
    %v298 = vpop.f32.mrf.mxu0
    %v299 = vpop.f32.mrf.mxu0
    %v300 = vadd.f32 %v63, %v299
    %v301 = vpop.f32.mrf.mxu0
    %302 = vmatprep.mubr.bf16.mxu0 0
    %303 = vmatmul.mubr.bf16.gmra.mxu0 %v189
    %v304 = vpop.f32.mrf.mxu0
    %v305 = vadd.f32 %v63, %v304
    %v306 = vpop.f32.mrf.mxu0
    %v307 = vpop.f32.mrf.mxu0
    %v308 = vadd.f32 %v63, %v307
    %v309 = vpop.f32.mrf.mxu0
    %310 = vmatprep.mubr.bf16.mxu0 0
    %311 = vmatmul.mubr.bf16.gmra.mxu0 %v192
    %v312 = vpop.f32.mrf.mxu0
    %v313 = vadd.f32 %v63, %v312
    %v314 = vpop.f32.mrf.mxu0
    %v315 = vpop.f32.mrf.mxu0
    %v316 = vadd.f32 %v63, %v315
    %v317 = vpop.f32.mrf.mxu0
    %318 = vmatprep.mubr.bf16.mxu0 0
    %319 = vmatmul.mubr.bf16.gmra.mxu0 %v195
    %v320 = vpop.f32.mrf.mxu0
    %v321 = vadd.f32 %v63, %v320
    %v322 = vpop.f32.mrf.mxu0
    %v323 = vpop.f32.mrf.mxu0
    %v324 = vadd.f32 %v63, %v323
    %v325 = vpop.f32.mrf.mxu0
    %326 = vmatprep.mubr.bf16.mxu0 0
    %327 = vmatmul.mubr.bf16.gmra.mxu0 %v198
    %v328 = vpop.f32.mrf.mxu0
    %v329 = vadd.f32 %v63, %v328
    %v330 = vpop.f32.mrf.mxu0
    %v331 = vpop.f32.mrf.mxu0
    %v332 = vadd.f32 %v63, %v331
    %v333 = vpop.f32.mrf.mxu0
    %334 = vmatprep.mubr.bf16.mxu0 0
    %335 = vmatmul.mubr.bf16.gmra.mxu0 %v201
    %v336 = vpop.f32.mrf.mxu0
    %v337 = vadd.f32 %v63, %v336
    %v338 = vpop.f32.mrf.mxu0
    %v339 = vpop.f32.mrf.mxu0
    %v340 = vadd.f32 %v63, %v339
    %v341 = vpop.f32.mrf.mxu0
    %342 = vmatprep.mubr.bf16.mxu0 0
    %343 = vmatmul.mubr.bf16.gmra.mxu0 %v204
    %v344 = vpop.f32.mrf.mxu0
    %v345 = vadd.f32 %v63, %v344
    %v346 = vpop.f32.mrf.mxu0
    %v347 = vpop.f32.mrf.mxu0
    %v348 = vadd.f32 %v63, %v347
    %v349 = vpop.f32.mrf.mxu0
    %350 = vmatprep.mubr.bf16.mxu0 0
    %351 = vmatmul.mubr.bf16.gmra.mxu0 %v207
    %v352 = vpop.f32.mrf.mxu0
    %v353 = vadd.f32 %v63, %v352
    %v354 = vpop.f32.mrf.mxu0
    %v355 = vpop.f32.mrf.mxu0
    %v356 = vadd.f32 %v63, %v355
    %v357 = vpop.f32.mrf.mxu0
    %358 = vmatprep.mubr.bf16.mxu0 0
    %359 = vmatmul.mubr.bf16.gmra.mxu0 %v210
    %v360 = vpop.f32.mrf.mxu0
    %v361 = vadd.f32 %v63, %v360
    %v362 = vpop.f32.mrf.mxu0
    %v363 = vpop.f32.mrf.mxu0
    %v364 = vadd.f32 %v63, %v363
    %v365 = vpop.f32.mrf.mxu0
    %366 = vmatprep.mubr.bf16.mxu0 0
    %367 = vmatmul.mubr.bf16.gmra.mxu0 %v213
    %v368 = vpop.f32.mrf.mxu0
    %v369 = vadd.f32 %v63, %v368
    %v370 = vpop.f32.mrf.mxu0
    %v371 = vpop.f32.mrf.mxu0
    %v372 = vadd.f32 %v63, %v371
    %v373 = vpop.f32.mrf.mxu0
    %374 = vmatprep.mubr.bf16.mxu0 0
    %375 = vmatmul.mubr.bf16.gmra.mxu0 %v216
    %v376 = vpop.f32.mrf.mxu0
    %v377 = vadd.f32 %v63, %v376
    %v378 = vpop.f32.mrf.mxu0
    %v379 = vpop.f32.mrf.mxu0
    %v380 = vadd.f32 %v63, %v379
    %v381 = vpop.f32.mrf.mxu0
    %382 = vmatprep.mubr.bf16.mxu0 0
    %383 = vmatmul.mubr.bf16.gmra.mxu0 %v219
    %v384 = vpop.f32.mrf.mxu0
    %v385 = vadd.f32 %v63, %v384
    %v386 = vpop.f32.mrf.mxu0
    %v387 = vpop.f32.mrf.mxu0
    %v388 = vadd.f32 %v63, %v387
    %v389 = vpop.f32.mrf.mxu0
    %390 = vmatprep.mubr.bf16.mxu0 0
    %391 = vmatmul.mubr.bf16.gmra.mxu0 %v222
    %v392 = vpop.f32.mrf.mxu0
    %v393 = vadd.f32 %v63, %v392
    %v394 = vpop.f32.mrf.mxu0
    %v395 = vpop.f32.mrf.mxu0
    %v396 = vadd.f32 %v63, %v395
    %v397 = vpop.f32.mrf.mxu0
    %398 = vmatprep.mubr.bf16.mxu0 0
    %399 = vmatmul.mubr.bf16.gmra.mxu0 %v225
    %v400 = vpop.f32.mrf.mxu0
    %v401 = vadd.f32 %v63, %v400
    %v402 = vpop.f32.mrf.mxu0
    %v403 = vpop.f32.mrf.mxu0
    %v404 = vadd.f32 %v63, %v403
    %v405 = vpop.f32.mrf.mxu0
    %406 = vmatprep.mubr.bf16.mxu0 0
    %407 = vmatmul.mubr.bf16.gmra.mxu0 %v228
    %v408 = vpop.f32.mrf.mxu0
    %v409 = vadd.f32 %v63, %v408
    %v410 = vpop.f32.mrf.mxu0
    %v411 = vpop.f32.mrf.mxu0
    %v412 = vadd.f32 %v63, %v411
    %v413 = vpop.f32.mrf.mxu0
    %414 = vdwg.mxu0
    %415 = vmax.xlane.f32.xlu0 %v265
    %v416 = vpop.xlane.xlu0 %415
    %417 = vmax.xlane.f32.xlu0 %v268
    %v418 = vpop.xlane.xlu0 %417
    %419 = vmax.xlane.f32.xlu0 %v273
    %v420 = vpop.xlane.xlu0 %419
    %421 = vmax.xlane.f32.xlu0 %v276
    %v422 = vpop.xlane.xlu0 %421
    %423 = vmax.xlane.f32.xlu0 %v281
    %v424 = vpop.xlane.xlu0 %423
    %425 = vmax.xlane.f32.xlu0 %v284
    %v426 = vpop.xlane.xlu0 %425
    %427 = vmax.xlane.f32.xlu0 %v289
    %v428 = vpop.xlane.xlu0 %427
    %429 = vmax.xlane.f32.xlu0 %v292
    %v430 = vpop.xlane.xlu0 %429
    %431 = vmax.xlane.f32.xlu0 %v297
    %v432 = vpop.xlane.xlu0 %431
    %433 = vmax.xlane.f32.xlu0 %v300
    %v434 = vpop.xlane.xlu0 %433
    %435 = vmax.xlane.f32.xlu0 %v305
    %v436 = vpop.xlane.xlu0 %435
    %437 = vmax.xlane.f32.xlu0 %v308
    %v438 = vpop.xlane.xlu0 %437
    %439 = vmax.xlane.f32.xlu0 %v313
    %v440 = vpop.xlane.xlu0 %439
    %441 = vmax.xlane.f32.xlu0 %v316
    %v442 = vpop.xlane.xlu0 %441
    %443 = vmax.xlane.f32.xlu0 %v321
    %v444 = vpop.xlane.xlu0 %443
    %445 = vmax.xlane.f32.xlu0 %v324
    %v446 = vpop.xlane.xlu0 %445
    %447 = vmax.xlane.f32.xlu0 %v329
    %v448 = vpop.xlane.xlu0 %447
    %449 = vmax.xlane.f32.xlu0 %v332
    %v450 = vpop.xlane.xlu0 %449
    %451 = vmax.xlane.f32.xlu0 %v337
    %v452 = vpop.xlane.xlu0 %451
    %453 = vmax.xlane.f32.xlu0 %v340
    %v454 = vpop.xlane.xlu0 %453
    %455 = vmax.xlane.f32.xlu0 %v345
    %v456 = vpop.xlane.xlu0 %455
    %457 = vmax.xlane.f32.xlu0 %v348
    %v458 = vpop.xlane.xlu0 %457
    %459 = vmax.xlane.f32.xlu0 %v353
    %v460 = vpop.xlane.xlu0 %459
    %461 = vmax.xlane.f32.xlu0 %v356
    %v462 = vpop.xlane.xlu0 %461
    %463 = vmax.xlane.f32.xlu0 %v361
    %v464 = vpop.xlane.xlu0 %463
    %465 = vmax.xlane.f32.xlu0 %v364
    %v466 = vpop.xlane.xlu0 %465
    %467 = vmax.xlane.f32.xlu0 %v369
    %v468 = vpop.xlane.xlu0 %467
    %469 = vmax.xlane.f32.xlu0 %v372
    %v470 = vpop.xlane.xlu0 %469
    %471 = vmax.xlane.f32.xlu0 %v377
    %v472 = vpop.xlane.xlu0 %471
    %473 = vmax.xlane.f32.xlu0 %v380
    %v474 = vpop.xlane.xlu0 %473
    %475 = vmax.xlane.f32.xlu0 %v385
    %v476 = vpop.xlane.xlu0 %475
    %477 = vmax.xlane.f32.xlu0 %v388
    %v478 = vpop.xlane.xlu0 %477
    %479 = vmax.xlane.f32.xlu0 %v393
    %v480 = vpop.xlane.xlu0 %479
    %481 = vmax.xlane.f32.xlu0 %v396
    %v482 = vpop.xlane.xlu0 %481
    %483 = vmax.xlane.f32.xlu0 %v401
    %v484 = vpop.xlane.xlu0 %483
    %485 = vmax.xlane.f32.xlu0 %v404
    %v486 = vpop.xlane.xlu0 %485
    %487 = vmax.xlane.f32.xlu0 %v409
    %v488 = vpop.xlane.xlu0 %487
    %489 = vmax.xlane.f32.xlu0 %v412
    %v490 = vpop.xlane.xlu0 %489
    %v491 = vsub.f32 %v265, %v416
    %v492 = vsub.f32 %v268, %v418
    %v493 = vsub.f32 %v273, %v420
    %v494 = vsub.f32 %v276, %v422
    %v495 = vsub.f32 %v281, %v424
    %v496 = vsub.f32 %v284, %v426
    %v497 = vsub.f32 %v289, %v428
    %v498 = vsub.f32 %v292, %v430
    %v499 = vsub.f32 %v297, %v432
    %v500 = vsub.f32 %v300, %v434
    %v501 = vsub.f32 %v305, %v436
    %v502 = vsub.f32 %v308, %v438
    %v503 = vsub.f32 %v313, %v440
    %v504 = vsub.f32 %v316, %v442
    %v505 = vsub.f32 %v321, %v444
    %v506 = vsub.f32 %v324, %v446
    %v507 = vsub.f32 %v329, %v448
    %v508 = vsub.f32 %v332, %v450
    %v509 = vsub.f32 %v337, %v452
    %v510 = vsub.f32 %v340, %v454
    %v511 = vsub.f32 %v345, %v456
    %v512 = vsub.f32 %v348, %v458
    %v513 = vsub.f32 %v353, %v460
    %v514 = vsub.f32 %v356, %v462
    %v515 = vsub.f32 %v361, %v464
    %v516 = vsub.f32 %v364, %v466
    %v517 = vsub.f32 %v369, %v468
    %v518 = vsub.f32 %v372, %v470
    %v519 = vsub.f32 %v377, %v472
    %v520 = vsub.f32 %v380, %v474
    %v521 = vsub.f32 %v385, %v476
    %v522 = vsub.f32 %v388, %v478
    %v523 = vsub.f32 %v393, %v480
    %v524 = vsub.f32 %v396, %v482
    %v525 = vsub.f32 %v401, %v484
    %v526 = vsub.f32 %v404, %v486
    %v527 = vsub.f32 %v409, %v488
    %v528 = vsub.f32 %v412, %v490
    %v529 = vmul.f32 %v491, 1.442695
    %v530 = vpow.pop %v529
    %v531 = vmul.f32 %v492, 1.442695
    %v532 = vpow.pop %v531
    %v533 = vmul.f32 %v493, 1.442695
    %v534 = vpow.pop %v533
    %v535 = vmul.f32 %v494, 1.442695
    %v536 = vpow.pop %v535
    %v537 = vmul.f32 %v495, 1.442695
    %v538 = vpow.pop %v537
    %v539 = vmul.f32 %v496, 1.442695
    %v540 = vpow.pop %v539
    %v541 = vmul.f32 %v497, 1.442695
    %v542 = vpow.pop %v541
    %v543 = vmul.f32 %v498, 1.442695
    %v544 = vpow.pop %v543
    %v545 = vmul.f32 %v499, 1.442695
    %v546 = vpow.pop %v545
    %v547 = vmul.f32 %v500, 1.442695
    %v548 = vpow.pop %v547
    %v549 = vmul.f32 %v501, 1.442695
    %v550 = vpow.pop %v549
    %v551 = vmul.f32 %v502, 1.442695
    %v552 = vpow.pop %v551
    %v553 = vmul.f32 %v503, 1.442695
    %v554 = vpow.pop %v553
    %v555 = vmul.f32 %v504, 1.442695
    %v556 = vpow.pop %v555
    %v557 = vmul.f32 %v505, 1.442695
    %v558 = vpow.pop %v557
    %v559 = vmul.f32 %v506, 1.442695
    %v560 = vpow.pop %v559
    %v561 = vmul.f32 %v507, 1.442695
    %v562 = vpow.pop %v561
    %v563 = vmul.f32 %v508, 1.442695
    %v564 = vpow.pop %v563
    %v565 = vmul.f32 %v509, 1.442695
    %v566 = vpow.pop %v565
    %v567 = vmul.f32 %v510, 1.442695
    %v568 = vpow.pop %v567
    %v569 = vmul.f32 %v511, 1.442695
    %v570 = vpow.pop %v569
    %v571 = vmul.f32 %v512, 1.442695
    %v572 = vpow.pop %v571
    %v573 = vmul.f32 %v513, 1.442695
    %v574 = vpow.pop %v573
    %v575 = vmul.f32 %v514, 1.442695
    %v576 = vpow.pop %v575
    %v577 = vmul.f32 %v515, 1.442695
    %v578 = vpow.pop %v577
    %v579 = vmul.f32 %v516, 1.442695
    %v580 = vpow.pop %v579
    %v581 = vmul.f32 %v517, 1.442695
    %v582 = vpow.pop %v581
    %v583 = vmul.f32 %v518, 1.442695
    %v584 = vpow.pop %v583
    %v585 = vmul.f32 %v519, 1.442695
    %v586 = vpow.pop %v585
    %v587 = vmul.f32 %v520, 1.442695
    %v588 = vpow.pop %v587
    %v589 = vmul.f32 %v521, 1.442695
    %v590 = vpow.pop %v589
    %v591 = vmul.f32 %v522, 1.442695
    %v592 = vpow.pop %v591
    %v593 = vmul.f32 %v523, 1.442695
    %v594 = vpow.pop %v593
    %v595 = vmul.f32 %v524, 1.442695
    %v596 = vpow.pop %v595
    %v597 = vmul.f32 %v525, 1.442695
    %v598 = vpow.pop %v597
    %v599 = vmul.f32 %v526, 1.442695
    %v600 = vpow.pop %v599
    %v601 = vmul.f32 %v527, 1.442695
    %v602 = vpow.pop %v601
    %v603 = vmul.f32 %v528, 1.442695
    %v604 = vpow.pop %v603
    %605 = vadd.xlane.f32.xlu0 %v530
    %v606 = vpop.xlane.xlu0 %605
    %607 = vadd.xlane.f32.xlu0 %v532
    %v608 = vpop.xlane.xlu0 %607
    %609 = vadd.xlane.f32.xlu0 %v534
    %v610 = vpop.xlane.xlu0 %609
    %611 = vadd.xlane.f32.xlu0 %v536
    %v612 = vpop.xlane.xlu0 %611
    %613 = vadd.xlane.f32.xlu0 %v538
    %v614 = vpop.xlane.xlu0 %613
    %615 = vadd.xlane.f32.xlu0 %v540
    %v616 = vpop.xlane.xlu0 %615
    %617 = vadd.xlane.f32.xlu0 %v542
    %v618 = vpop.xlane.xlu0 %617
    %619 = vadd.xlane.f32.xlu0 %v544
    %v620 = vpop.xlane.xlu0 %619
    %621 = vadd.xlane.f32.xlu0 %v546
    %v622 = vpop.xlane.xlu0 %621
    %623 = vadd.xlane.f32.xlu0 %v548
    %v624 = vpop.xlane.xlu0 %623
    %625 = vadd.xlane.f32.xlu0 %v550
    %v626 = vpop.xlane.xlu0 %625
    %627 = vadd.xlane.f32.xlu0 %v552
    %v628 = vpop.xlane.xlu0 %627
    %629 = vadd.xlane.f32.xlu0 %v554
    %v630 = vpop.xlane.xlu0 %629
    %631 = vadd.xlane.f32.xlu0 %v556
    %v632 = vpop.xlane.xlu0 %631
    %633 = vadd.xlane.f32.xlu0 %v558
    %v634 = vpop.xlane.xlu0 %633
    %635 = vadd.xlane.f32.xlu0 %v560
    %v636 = vpop.xlane.xlu0 %635
    %637 = vadd.xlane.f32.xlu0 %v562
    %v638 = vpop.xlane.xlu0 %637
    %639 = vadd.xlane.f32.xlu0 %v564
    %v640 = vpop.xlane.xlu0 %639
    %641 = vadd.xlane.f32.xlu0 %v566
    %v642 = vpop.xlane.xlu0 %641
    %643 = vadd.xlane.f32.xlu0 %v568
    %v644 = vpop.xlane.xlu0 %643
    %645 = vadd.xlane.f32.xlu0 %v570
    %v646 = vpop.xlane.xlu0 %645
    %647 = vadd.xlane.f32.xlu0 %v572
    %v648 = vpop.xlane.xlu0 %647
    %649 = vadd.xlane.f32.xlu0 %v574
    %v650 = vpop.xlane.xlu0 %649
    %651 = vadd.xlane.f32.xlu0 %v576
    %v652 = vpop.xlane.xlu0 %651
    %653 = vadd.xlane.f32.xlu0 %v578
    %v654 = vpop.xlane.xlu0 %653
    %655 = vadd.xlane.f32.xlu0 %v580
    %v656 = vpop.xlane.xlu0 %655
    %657 = vadd.xlane.f32.xlu0 %v582
    %v658 = vpop.xlane.xlu0 %657
    %659 = vadd.xlane.f32.xlu0 %v584
    %v660 = vpop.xlane.xlu0 %659
    %661 = vadd.xlane.f32.xlu0 %v586
    %v662 = vpop.xlane.xlu0 %661
    %663 = vadd.xlane.f32.xlu0 %v588
    %v664 = vpop.xlane.xlu0 %663
    %665 = vadd.xlane.f32.xlu0 %v590
    %v666 = vpop.xlane.xlu0 %665
    %667 = vadd.xlane.f32.xlu0 %v592
    %v668 = vpop.xlane.xlu0 %667
    %669 = vadd.xlane.f32.xlu0 %v594
    %v670 = vpop.xlane.xlu0 %669
    %671 = vadd.xlane.f32.xlu0 %v596
    %v672 = vpop.xlane.xlu0 %671
    %673 = vadd.xlane.f32.xlu0 %v598
    %v674 = vpop.xlane.xlu0 %673
    %675 = vadd.xlane.f32.xlu0 %v600
    %v676 = vpop.xlane.xlu0 %675
    %677 = vadd.xlane.f32.xlu0 %v602
    %v678 = vpop.xlane.xlu0 %677
    %679 = vadd.xlane.f32.xlu0 %v604
    %v680 = vpop.xlane.xlu0 %679
    %v681 = vrcp.pop %v606
    %v682 = vrcp.pop %v608
    %v683 = vrcp.pop %v610
    %v684 = vrcp.pop %v612
    %v685 = vrcp.pop %v614
    %v686 = vrcp.pop %v616
    %v687 = vrcp.pop %v618
    %v688 = vrcp.pop %v620
    %v689 = vrcp.pop %v622
    %v690 = vrcp.pop %v624
    %v691 = vrcp.pop %v626
    %v692 = vrcp.pop %v628
    %v693 = vrcp.pop %v630
    %v694 = vrcp.pop %v632
    %v695 = vrcp.pop %v634
    %v696 = vrcp.pop %v636
    %v697 = vrcp.pop %v638
    %v698 = vrcp.pop %v640
    %v699 = vrcp.pop %v642
    %v700 = vrcp.pop %v644
    %v701 = vrcp.pop %v646
    %v702 = vrcp.pop %v648
    %v703 = vrcp.pop %v650
    %v704 = vrcp.pop %v652
    %v705 = vrcp.pop %v654
    %v706 = vrcp.pop %v656
    %v707 = vrcp.pop %v658
    %v708 = vrcp.pop %v660
    %v709 = vrcp.pop %v662
    %v710 = vrcp.pop %v664
    %v711 = vrcp.pop %v666
    %v712 = vrcp.pop %v668
    %v713 = vrcp.pop %v670
    %v714 = vrcp.pop %v672
    %v715 = vrcp.pop %v674
    %v716 = vrcp.pop %v676
    %v717 = vrcp.pop %v678
    %v718 = vrcp.pop %v680
    %v719 = vmul.f32 %v530, %v681
    %v720 = vmul.f32 %v532, %v682
    %v721 = vmul.f32 %v534, %v683
    %v722 = vmul.f32 %v536, %v684
    %v723 = vmul.f32 %v538, %v685
    %v724 = vmul.f32 %v540, %v686
    %v725 = vmul.f32 %v542, %v687
    %v726 = vmul.f32 %v544, %v688
    %v727 = vmul.f32 %v546, %v689
    %v728 = vmul.f32 %v548, %v690
    %v729 = vmul.f32 %v550, %v691
    %v730 = vmul.f32 %v552, %v692
    %v731 = vmul.f32 %v554, %v693
    %v732 = vmul.f32 %v556, %v694
    %v733 = vmul.f32 %v558, %v695
    %v734 = vmul.f32 %v560, %v696
    %v735 = vmul.f32 %v562, %v697
    %v736 = vmul.f32 %v564, %v698
    %v737 = vmul.f32 %v566, %v699
    %v738 = vmul.f32 %v568, %v700
    %v739 = vmul.f32 %v570, %v701
    %v740 = vmul.f32 %v572, %v702
    %v741 = vmul.f32 %v574, %v703
    %v742 = vmul.f32 %v576, %v704
    %v743 = vmul.f32 %v578, %v705
    %v744 = vmul.f32 %v580, %v706
    %v745 = vmul.f32 %v582, %v707
    %v746 = vmul.f32 %v584, %v708
    %v747 = vmul.f32 %v586, %v709
    %v748 = vmul.f32 %v588, %v710
    %v749 = vmul.f32 %v590, %v711
    %v750 = vmul.f32 %v592, %v712
    %v751 = vmul.f32 %v594, %v713
    %v752 = vmul.f32 %v596, %v714
    %v753 = vmul.f32 %v598, %v715
    %v754 = vmul.f32 %v600, %v716
    %v755 = vmul.f32 %v602, %v717
    %v756 = vmul.f32 %v604, %v718
    %v757 = vpack.c.bf16 %v720, %v719
    %v758 = vpack.c.bf16 %v722, %v721
    %v759 = vpack.c.bf16 %v724, %v723
    %v760 = vpack.c.bf16 %v726, %v725
    %v761 = vpack.c.bf16 %v728, %v727
    %v762 = vpack.c.bf16 %v730, %v729
    %v763 = vpack.c.bf16 %v732, %v731
    %v764 = vpack.c.bf16 %v734, %v733
    %v765 = vpack.c.bf16 %v736, %v735
    %v766 = vpack.c.bf16 %v738, %v737
    %v767 = vpack.c.bf16 %v740, %v739
    %v768 = vpack.c.bf16 %v742, %v741
    %v769 = vpack.c.bf16 %v744, %v743
    %v770 = vpack.c.bf16 %v746, %v745
    %v771 = vpack.c.bf16 %v748, %v747
    %v772 = vpack.c.bf16 %v750, %v749
    %v773 = vpack.c.bf16 %v752, %v751
    %v774 = vpack.c.bf16 %v754, %v753
    %v775 = vpack.c.bf16 %v756, %v755
    %v795 = vunpack.c.l.b16 %v757
    %v796 = vunpack.c.h.b16 %v757
    %v797 = vunpack.c.l.b16 %v758
    %v798 = vunpack.c.h.b16 %v758
    %v799 = vunpack.c.l.b16 %v759
    %v800 = vunpack.c.h.b16 %v759
    %v801 = vunpack.c.l.b16 %v760
    %v802 = vunpack.c.h.b16 %v760
    %v803 = vunpack.c.l.b16 %v761
    %v804 = vunpack.c.h.b16 %v761
    %v805 = vunpack.c.l.b16 %v762
    %v806 = vunpack.c.h.b16 %v762
    %v807 = vunpack.c.l.b16 %v763
    %v808 = vunpack.c.h.b16 %v763
    %v809 = vunpack.c.l.b16 %v764
    %v810 = vunpack.c.h.b16 %v764
    %v811 = vunpack.c.l.b16 %v765
    %v812 = vunpack.c.h.b16 %v765
    %v813 = vunpack.c.l.b16 %v766
    %v814 = vunpack.c.h.b16 %v766
    %v815 = vunpack.c.l.b16 %v767
    %v816 = vunpack.c.h.b16 %v767
    %v817 = vunpack.c.l.b16 %v768
    %v818 = vunpack.c.h.b16 %v768
    %v819 = vunpack.c.l.b16 %v769
    %v820 = vunpack.c.h.b16 %v769
    %v821 = vunpack.c.l.b16 %v770
    %v822 = vunpack.c.h.b16 %v770
    %v823 = vunpack.c.l.b16 %v771
    %v824 = vunpack.c.h.b16 %v771
    %v825 = vunpack.c.l.b16 %v772
    %v826 = vunpack.c.h.b16 %v772
    %v827 = vunpack.c.l.b16 %v773
    %v828 = vunpack.c.h.b16 %v773
    %v829 = vunpack.c.l.b16 %v774
    %v830 = vunpack.c.h.b16 %v774
    %v831 = vunpack.c.l.b16 %v775
    %v832 = vunpack.c.h.b16 %v775
    %v833 = vpack.c.b16 %v795, %v795
    %v834 = vpack.c.b16 %v796, %v796
    %v835 = vpack.c.b16 %v797, %v797
    %v836 = vpack.c.b16 %v798, %v798
    %v837 = vpack.c.b16 %v799, %v799
    %v838 = vpack.c.b16 %v800, %v800
    %v839 = vpack.c.b16 %v801, %v801
    %v840 = vpack.c.b16 %v802, %v802
    %v841 = vpack.c.b16 %v803, %v803
    %v842 = vpack.c.b16 %v804, %v804
    %v843 = vpack.c.b16 %v805, %v805
    %v844 = vpack.c.b16 %v806, %v806
    %v845 = vpack.c.b16 %v807, %v807
    %v846 = vpack.c.b16 %v808, %v808
    %v847 = vpack.c.b16 %v809, %v809
    %v848 = vpack.c.b16 %v810, %v810
    %v849 = vpack.c.b16 %v811, %v811
    %v850 = vpack.c.b16 %v812, %v812
    %v851 = vpack.c.b16 %v813, %v813
    %v852 = vpack.c.b16 %v814, %v814
    %v853 = vpack.c.b16 %v815, %v815
    %v854 = vpack.c.b16 %v816, %v816
    %v855 = vpack.c.b16 %v817, %v817
    %v856 = vpack.c.b16 %v818, %v818
    %v857 = vpack.c.b16 %v819, %v819
    %v858 = vpack.c.b16 %v820, %v820
    %v859 = vpack.c.b16 %v821, %v821
    %v860 = vpack.c.b16 %v822, %v822
    %v861 = vpack.c.b16 %v823, %v823
    %v862 = vpack.c.b16 %v824, %v824
    %v863 = vpack.c.b16 %v825, %v825
    %v864 = vpack.c.b16 %v826, %v826
    %v865 = vpack.c.b16 %v827, %v827
    %v866 = vpack.c.b16 %v828, %v828
    %v867 = vpack.c.b16 %v829, %v829
    %v868 = vpack.c.b16 %v830, %v830
    %v869 = vpack.c.b16 %v831, %v831
    %v870 = vpack.c.b16 %v832, %v832
    %909 = vst [vmem:[#allocation2] sm:$0xf] %v833
    %910 = vst [vmem:[#allocation2 + $0x4] sm:$0xf] %v834
    %911 = vst [vmem:[#allocation2 + $0x8] sm:$0xf] %v835
    %912 = vst [vmem:[#allocation2 + $0xc] sm:$0xf] %v836
    %913 = vst [vmem:[#allocation2 + $0x10] sm:$0xf] %v837
    %914 = vst [vmem:[#allocation2 + $0x14] sm:$0xf] %v838
    %915 = vst [vmem:[#allocation2 + $0x18] sm:$0xf] %v839
    %916 = vst [vmem:[#allocation2 + $0x1c] sm:$0xf] %v840
    %917 = vst [vmem:[#allocation2 + $0x20] sm:$0xf] %v841
    %918 = vst [vmem:[#allocation2 + $0x24] sm:$0xf] %v842
    %919 = vst [vmem:[#allocation2 + $0x28] sm:$0xf] %v843
    %920 = vst [vmem:[#allocation2 + $0x2c] sm:$0xf] %v844
    %921 = vst [vmem:[#allocation2 + $0x30] sm:$0xf] %v845
    %922 = vst [vmem:[#allocation2 + $0x34] sm:$0xf] %v846
    %923 = vst [vmem:[#allocation2 + $0x38] sm:$0xf] %v847
    %924 = vst [vmem:[#allocation2 + $0x3c] sm:$0xf] %v848
    %925 = vst [vmem:[#allocation2 + $0x40] sm:$0xf] %v849
    %926 = vst [vmem:[#allocation2 + $0x44] sm:$0xf] %v850
    %927 = vst [vmem:[#allocation2 + $0x48] sm:$0xf] %v851
    %928 = vst [vmem:[#allocation2 + $0x4c] sm:$0xf] %v852
    %929 = vst [vmem:[#allocation2 + $0x50] sm:$0xf] %v853
    %930 = vst [vmem:[#allocation2 + $0x54] sm:$0xf] %v854
    %931 = vst [vmem:[#allocation2 + $0x58] sm:$0xf] %v855
    %932 = vst [vmem:[#allocation2 + $0x5c] sm:$0xf] %v856
    %933 = vst [vmem:[#allocation2 + $0x60] sm:$0xf] %v857
    %934 = vst [vmem:[#allocation2 + $0x64] sm:$0xf] %v858
    %935 = vst [vmem:[#allocation2 + $0x68] sm:$0xf] %v859
    %936 = vst [vmem:[#allocation2 + $0x6c] sm:$0xf] %v860
    %937 = vst [vmem:[#allocation2 + $0x70] sm:$0xf] %v861
    %938 = vst [vmem:[#allocation2 + $0x74] sm:$0xf] %v862
    %939 = vst [vmem:[#allocation2 + $0x78] sm:$0xf] %v863
    %940 = vst [vmem:[#allocation2 + $0x7c] sm:$0xf] %v864
    %941 = vst [vmem:[#allocation2 + $0x80] sm:$0xf] %v865
    %942 = vst [vmem:[#allocation2 + $0x84] sm:$0xf] %v866
    %943 = vst [vmem:[#allocation2 + $0x88] sm:$0xf] %v867
    %944 = vst [vmem:[#allocation2 + $0x8c] sm:$0xf] %v868
    %945 = vst [vmem:[#allocation2 + $0x90] sm:$0xf] %v869
    %946 = vst [vmem:[#allocation2 + $0x94] sm:$0xf] %v870
    // Predicated region
    $region14: #{tpu_custom_call.1} parent=1 // pred_check
      _
    $region15: #{tpu_custom_call.1} parent=1 // pred_check_branch
      %948 = sbr.rel (0) target = $region17
    $region16: #{tpu_custom_call.1} parent=1 // pred_region
      %s950 = ssub.s32 2432, 2432
      %951 = vsyncadd [#allocation3], %s950
      %s952 = sshll.u32 [#allocation2], 4
      %s953 = int_to_ptr.vmem [resolvable:$true] %s952
      %958 = dma.vmem_to_hbm [thread:$0]  %s953, 2432, %s3, [#allocation3], 64, 64, 4
    $region17: #{tpu_custom_call.1} parent=1 // pred_fallthru
      _
    // Predicated region
    $region18: #{tpu_custom_call.1} parent=1 // pred_check
      _
    $region19: #{tpu_custom_call.1} parent=1 // pred_check_branch
      %960 = sbr.rel (0) target = $region21
    $region20: #{tpu_custom_call.1} parent=1 // pred_region
      %961 = dma.done [#allocation3], 2432
    $region21: #{tpu_custom_call.1} parent=1 // pred_fallthru
      _
    %962 = vsyncpa [#allocation3], 1

</llo_original>
